<compile_context>
chip_gen: v7x
topology: tpu7x:2x2x1
jax: 0.10.0
libtpu: 0.0.40
codegen_flags: <defaults>
</compile_context>

<pallas_src>
import functools
import math

import numpy as np

import jax
import jax.numpy as jnp
from jax.experimental import pallas as pl
from jax.experimental.pallas import tpu as pltpu

# ---- module hyper-parameters (match the PyTorch constructor) ----
DIM = 32                      # dim
NUM_HEADS = 4                 # num_heads
HEAD_DIM = DIM // NUM_HEADS
MLP_HIDDEN = int(DIM * 2.0)   # mlp_ratio = 2.0
SEQ = 8                       # N tokens (row 0 = CLS)
BATCH = 2
ETA = 0.5                     # eta (layer-scale init)
EPS = 1e-5                    # nn.LayerNorm default eps
SCALE = HEAD_DIM ** -0.5
SQRT2 = math.sqrt(2.0)

# ---- packed parameter / constant slab layout: lane-dense (rows, 128) ----
PK_W = 128
R_WQKV, C_WQKV = 0, 0            # (32, 96)
R_WPROJ, C_WPROJ = 0, 96         # (32, 32)
R_WFC2, C_WFC2 = 32, 0           # (64, 32)
R_WFC1, C_WFC1 = 32, 32          # (32, 64)
R_HCN, C_HCN = 32, 96            # head one-hot (C, NH)
R_HNC, C_HNC = 96, 0             # head one-hot (NH, C)
R_VEC = 100                      # 10 per-row vectors
(V_N1W, V_N1B, V_BQKV, V_BPROJ, V_N2W, V_N2B,
 V_BFC1, V_BFC2, V_G1, V_G2) = range(10)
R_SEL = 112                      # S_CE (M,M) | S_BE (M,M) | cls_mask (M,1)


def _pk_rows(m):
    return ((R_SEL + 3 * m + 7) // 8) * 8


def pack_params(params, *, bblk, seq):
    """Host-side ONE-TIME packing of all weights + constant selector matrices
    into a single lane-dense f32 slab (one parameter DMA per grid step)."""
    m = bblk * seq
    (n1w, n1b, wqkv, bqkv, wproj, bproj, n2w, n2b,
     wfc1, bfc1, wfc2, bfc2, g1, g2) = [np.asarray(p, np.float32) for p in params]

    pk = np.zeros((_pk_rows(m), PK_W), np.float32)
    pk[R_WQKV:R_WQKV + DIM, C_WQKV:C_WQKV + 3 * DIM] = wqkv
    pk[R_WPROJ:R_WPROJ + DIM, C_WPROJ:C_WPROJ + DIM] = wproj
    pk[R_WFC2:R_WFC2 + MLP_HIDDEN, C_WFC2:C_WFC2 + DIM] = wfc2
    pk[R_WFC1:R_WFC1 + DIM, C_WFC1:C_WFC1 + MLP_HIDDEN] = wfc1

    head_cn = (np.arange(DIM)[:, None] // HEAD_DIM
               == np.arange(NUM_HEADS)[None, :]).astype(np.float32)
    pk[R_HCN:R_HCN + DIM, C_HCN:C_HCN + NUM_HEADS] = head_cn
    pk[R_HNC:R_HNC + NUM_HEADS, C_HNC:C_HNC + DIM] = head_cn.T

    for i, vv in enumerate((n1w, n1b, bqkv, bproj, n2w, n2b,
                            bfc1, bfc2, g1, g2)):
        vv = vv.reshape(1, -1)
        pk[R_VEC + i, :vv.shape[1]] = vv[0]

    batch = np.arange(m) // seq
    s_ce = (np.arange(m)[None, :] == (batch * seq)[:, None]).astype(np.float32)
    s_be = (batch[:, None] == batch[None, :]).astype(np.float32)
    cls_mask = (np.arange(m) % seq == 0).astype(np.float32)
    pk[R_SEL:R_SEL + m, :m] = s_ce
    pk[R_SEL + m:R_SEL + 2 * m, :m] = s_be
    pk[R_SEL + 2 * m:R_SEL + 3 * m, 0:1] = cls_mask[:, None]
    return jnp.asarray(pk)


def _erf(z):
    # Abramowitz & Stegun 7.1.26, |error| < 1.5e-7; only exp/mul/add/where,
    # all guaranteed Mosaic lowerings, so exact-GELU stays within 1e-5 of the
    # erf-based reference.
    a1, a2, a3, a4, a5 = (0.254829592, -0.284496736, 1.421413741,
                          -1.453152027, 1.061405429)
    p = 0.3275911
    az = jnp.abs(z)
    t = 1.0 / (1.0 + p * az)
    poly = ((((a5 * t + a4) * t + a3) * t + a2) * t + a1) * t
    e = 1.0 - poly * jnp.exp(-az * az)
    return jnp.where(z < 0.0, -e, e)


def _class_attn_kernel(x_ref, pk_ref, o_ref, *, bblk, seq):
    m = bblk * seq
    x = x_ref[...].astype(jnp.float32)                       # (M, C)

    # ---- packed weights / constants (static slices of the single pk DMA) ----
    wqkv = pk_ref[R_WQKV:R_WQKV + DIM, C_WQKV:C_WQKV + 3 * DIM]
    wproj = pk_ref[R_WPROJ:R_WPROJ + DIM, C_WPROJ:C_WPROJ + DIM]
    wfc1 = pk_ref[R_WFC1:R_WFC1 + DIM, C_WFC1:C_WFC1 + MLP_HIDDEN]
    wfc2 = pk_ref[R_WFC2:R_WFC2 + MLP_HIDDEN, C_WFC2:C_WFC2 + DIM]
    head_cn = pk_ref[R_HCN:R_HCN + DIM, C_HCN:C_HCN + NUM_HEADS]   # (C, NH)
    head_nc = pk_ref[R_HNC:R_HNC + NUM_HEADS, C_HNC:C_HNC + DIM]   # (NH, C)

    def vec(i, width=DIM):
        r = R_VEC + i
        return pk_ref[r:r + 1, 0:width]

    n1w, n1b = vec(V_N1W), vec(V_N1B)
    bqkv, bproj = vec(V_BQKV, 3 * DIM), vec(V_BPROJ)
    n2w, n2b = vec(V_N2W), vec(V_N2B)
    bfc1, bfc2 = vec(V_BFC1, MLP_HIDDEN), vec(V_BFC2)
    g1, g2 = vec(V_G1), vec(V_G2)

    s_ce = pk_ref[R_SEL:R_SEL + m, 0:m]                  # row -> its batch's CLS row
    s_be = pk_ref[R_SEL + m:R_SEL + 2 * m, 0:m]          # per-batch sum + broadcast
    cls_mask = pk_ref[R_SEL + 2 * m:R_SEL + 3 * m, 0:1]  # 1.0 at CLS rows

    def layernorm(v, w, b):
        mu = jnp.mean(v, axis=-1, keepdims=True)
        d = v - mu
        var = jnp.mean(d * d, axis=-1, keepdims=True)
        return d * jax.lax.rsqrt(var + EPS) * w + b       # rsqrt -> EUP

    dot = functools.partial(jnp.dot, preferred_element_type=jnp.float32)

    # ---- norm1 + fused qkv projection (single dot for q, k and v) ----
    xn1 = layernorm(x, n1w, n1b)                          # (M, C)
    qkv = dot(xn1, wqkv) + bqkv                           # (M, 3C)
    q = qkv[:, 0:DIM]
    k = qkv[:, DIM:2 * DIM]
    v = qkv[:, 2 * DIM:3 * DIM]

    # ---- class attention: every row attends with its batch's CLS query ----
    q_rows = dot(s_ce, q) * SCALE                         # (M, C)
    logits = dot(q_rows * k, head_cn)                     # (M, NH)

    # per-batch numerically-stable softmax over the token axis
    parts = [jnp.broadcast_to(
        jnp.max(logits[b * seq:(b + 1) * seq, :], axis=0, keepdims=True),
        (seq, NUM_HEADS)) for b in range(bblk)]
    mx_rows = parts[0] if bblk == 1 else jnp.concatenate(parts, axis=0)
    p = jnp.exp(logits - mx_rows)                         # (M, NH)
    den = dot(s_be, p)                                    # per-batch sum, broadcast
    r = pl.reciprocal(den, approx=True)                   # EUP
    r = r * (2.0 - den * r)                               # one Newton step (keeps 1e-5)
    attn = p * r                                          # (M, NH)

    attn_full = dot(attn, head_nc)                        # (M, C)
    ctx_rows = dot(s_be, attn_full * v)                   # per-batch CLS context, bcast
    cls_attn = dot(ctx_rows, wproj) + bproj               # (M, C)

    # ---- CLS branch (valid at CLS rows; replicated elsewhere, masked out) ----
    x1_cls = x + g1 * cls_attn                            # == x1 at CLS rows
    x2_cls = layernorm(x1_cls, n2w, n2b)
    h = dot(x2_cls, wfc1) + bfc1                          # (M, H)
    h = 0.5 * h * (1.0 + _erf(h * (1.0 / SQRT2)))         # exact GELU
    mlp = dot(h, wfc2) + bfc2                             # (M, C)
    out_cls = x2_cls + g2 * mlp

    # ---- non-CLS rows: out = 2*(x + g1*xn1); single full-slab store ----
    out_other = 2.0 * (x + g1 * xn1)
    out = jnp.where(cls_mask > 0.5, out_cls, out_other)
    o_ref[...] = out.astype(o_ref.dtype)


@functools.partial(jax.jit, static_argnames=("num_blocks",))
def class_attention_block(x, pk, *, num_blocks=1):
    """x: (B, N, C); pk: pre-packed slab from pack_params (hoisted, one-time).
    num_blocks=1 -> whole batch in one grid step (best on single-TC v5e/v6e);
    num_blocks=2 -> two 'parallel' grid steps for v7x's two TensorCores."""
    B, N, C = x.shape
    assert C == DIM and B % num_blocks == 0
    bblk = B // num_blocks
    m = bblk * N
    assert pk.shape == (_pk_rows(m), PK_W)
    x2d = x.reshape(B * N, C)

    out2d = pl.pallas_call(
        functools.partial(_class_attn_kernel, bblk=bblk, seq=N),
        out_shape=jax.ShapeDtypeStruct((B * N, C), x.dtype),
        grid=(num_blocks,),
        in_specs=[
            pl.BlockSpec((m, C), lambda i: (i, 0)),
            pl.BlockSpec(pk.shape, lambda i: (0, 0)),   # constant block -> one fetch
        ],
        out_specs=pl.BlockSpec((m, C), lambda i: (i, 0)),
        compiler_params=pltpu.CompilerParams(dimension_semantics=("parallel",)),
    )(x2d, pk)
    return out2d.reshape(B, N, C)


# ----------------- pure-JAX reference (mirrors the PyTorch forward) -----------------
def ref_forward(x, params):
    (n1w, n1b, wqkv, bqkv, wproj, bproj, n2w, n2b,
     wfc1, bfc1, wfc2, bfc2, g1, g2) = params
    B, N, C = x.shape

    def ln(v, w, b):
        mu = v.mean(-1, keepdims=True)
        var = ((v - mu) ** 2).mean(-1, keepdims=True)
        return (v - mu) / jnp.sqrt(var + EPS) * w[0] + b[0]

    xn1 = ln(x, n1w, n1b)
    qkv = xn1 @ wqkv + bqkv[0]                                  # (B, N, 3C)
    q, k, v = jnp.split(qkv, 3, axis=-1)
    qh = q.reshape(B, N, NUM_HEADS, HEAD_DIM)
    kh = k.reshape(B, N, NUM_HEADS, HEAD_DIM)
    vh = v.reshape(B, N, NUM_HEADS, HEAD_DIM)
    attn = (qh[:, 0:1] * kh).sum(-1) * SCALE                    # (B, N, NH)
    attn = jax.nn.softmax(attn, axis=1)
    cls = jnp.einsum("bnh,bnhd->bhd", attn, vh).reshape(B, 1, C)
    cls = cls @ wproj + bproj[0]
    x_attn = jnp.concatenate([cls, xn1[:, 1:]], axis=1)
    x1 = x + g1[0] * x_attn
    x2 = jnp.concatenate([ln(x1[:, 0:1], n2w, n2b), x1[:, 1:]], axis=1)
    c = x2[:, 0:1]
    h = jax.nn.gelu(c @ wfc1 + bfc1[0], approximate=False)
    cm = g2[0] * (h @ wfc2 + bfc2[0])
    x3 = jnp.concatenate([cm, x2[:, 1:]], axis=1)
    return x2 + x3


if __name__ == "__main__":
    key = jax.random.PRNGKey(0)
    ks = jax.random.split(key, 12)

    def rnd(k, shape, scale=0.05):
        return (scale * jax.random.normal(k, shape)).astype(jnp.float32)

    # Deterministic parameter init (torch Linear weights pre-transposed to (in, out)).
    params = (
        jnp.ones((1, DIM), jnp.float32),                 # norm1 weight
        jnp.zeros((1, DIM), jnp.float32),                # norm1 bias
        rnd(ks[0], (DIM, 3 * DIM)),                      # qkv weight^T
        rnd(ks[1], (1, 3 * DIM)),                        # qkv bias (qkv_bias=True)
        rnd(ks[2], (DIM, DIM)),                          # proj weight^T
        rnd(ks[3], (1, DIM)),                            # proj bias
        jnp.ones((1, DIM), jnp.float32),                 # norm2 weight
        jnp.zeros((1, DIM), jnp.float32),                # norm2 bias
        rnd(ks[4], (DIM, MLP_HIDDEN)),                   # mlp fc1 weight^T
        rnd(ks[5], (1, MLP_HIDDEN)),                     # mlp fc1 bias
        rnd(ks[6], (MLP_HIDDEN, DIM)),                   # mlp fc2 weight^T
        rnd(ks[7], (1, DIM)),                            # mlp fc2 bias
        ETA * jnp.ones((1, DIM), jnp.float32),           # gamma1
        ETA * jnp.ones((1, DIM), jnp.float32),           # gamma2
    )

    x = jax.random.normal(ks[8], (BATCH, SEQ, DIM), dtype=jnp.float32)
    ref = ref_forward(x, params)

    # One-time host-side packing (hoisted out of the per-forward path).
    pk1 = pack_params(params, bblk=BATCH, seq=SEQ)           # num_blocks = 1
    out = jax.block_until_ready(class_attention_block(x, pk1, num_blocks=1))
    assert out.shape == (BATCH, SEQ, DIM)
    err = float(jnp.max(jnp.abs(out - ref)))
    assert jnp.allclose(out, ref, rtol=1e-5, atol=1e-5), f"max abs err = {err}"

    # v7x-friendly variant: two parallel grid steps so both TensorCores get work.
    pk2 = pack_params(params, bblk=BATCH // 2, seq=SEQ)      # num_blocks = 2
    out2 = jax.block_until_ready(class_attention_block(x, pk2, num_blocks=2))
    err2 = float(jnp.max(jnp.abs(out2 - ref)))
    assert jnp.allclose(out2, ref, rtol=1e-5, atol=1e-5), f"max abs err = {err2}"

    # TODO(synk): StochasticDepth(drop_path, mode='row') and Dropout are eval-mode
    # identities here; training-mode random row dropping is not implemented.
    print("KERNEL_OK")
</pallas_src>

<mosaic_0001>
module attributes {stable_mosaic.version = 11 : i64} {
  func.func @_class_attn_kernel(%arg0: i32, %arg1: memref<16x32xf32, #tpu.memory_space<vmem>>, %arg2: memref<160x128xf32, #tpu.memory_space<vmem>>, %arg3: memref<16x32xf32, #tpu.memory_space<vmem>>) attributes {dimension_semantics = [#tpu.dimension_semantics<parallel>], iteration_bounds = array<i64: 1>, scalar_prefetch = 0 : i64, scratch_operands = 0 : i64, tpu.core_type = #tpu.core_type<tc>, window_params = [{transform_indices = @transform_0, window_bounds = array<i64: 16, 32>}, {pipeline_mode = #tpu.pipeline_mode<synchronous>, transform_indices = @transform_1, window_bounds = array<i64: 160, 128>}, {transform_indices = @transform_2, window_bounds = array<i64: 16, 32>}]} {
    %c0 = arith.constant 0 : index
    %c0_0 = arith.constant 0 : index
    %0 = vector.load %arg1[%c0, %c0_0] : memref<16x32xf32, #tpu.memory_space<vmem>>, vector<16x32xf32>
    %c0_1 = arith.constant 0 : index
    %c0_2 = arith.constant 0 : index
    %1 = vector.load %arg2[%c0_1, %c0_2] : memref<160x128xf32, #tpu.memory_space<vmem>>, vector<32x96xf32>
    %c0_3 = arith.constant 0 : index
    %c96 = arith.constant 96 : index
    %2 = vector.load %arg2[%c0_3, %c96] : memref<160x128xf32, #tpu.memory_space<vmem>>, vector<32x32xf32>
    %c32 = arith.constant 32 : index
    %c32_4 = arith.constant 32 : index
    %3 = vector.load %arg2[%c32, %c32_4] : memref<160x128xf32, #tpu.memory_space<vmem>>, vector<32x64xf32>
    %c32_5 = arith.constant 32 : index
    %c0_6 = arith.constant 0 : index
    %4 = vector.load %arg2[%c32_5, %c0_6] : memref<160x128xf32, #tpu.memory_space<vmem>>, vector<64x32xf32>
    %c32_7 = arith.constant 32 : index
    %c96_8 = arith.constant 96 : index
    %5 = vector.load %arg2[%c32_7, %c96_8] : memref<160x128xf32, #tpu.memory_space<vmem>>, vector<32x4xf32>
    %c96_9 = arith.constant 96 : index
    %c0_10 = arith.constant 0 : index
    %6 = vector.load %arg2[%c96_9, %c0_10] : memref<160x128xf32, #tpu.memory_space<vmem>>, vector<4x32xf32>
    %c100 = arith.constant 100 : index
    %c0_11 = arith.constant 0 : index
    %7 = vector.load %arg2[%c100, %c0_11] : memref<160x128xf32, #tpu.memory_space<vmem>>, vector<1x32xf32>
    %c101 = arith.constant 101 : index
    %c0_12 = arith.constant 0 : index
    %8 = vector.load %arg2[%c101, %c0_12] : memref<160x128xf32, #tpu.memory_space<vmem>>, vector<1x32xf32>
    %c102 = arith.constant 102 : index
    %c0_13 = arith.constant 0 : index
    %9 = vector.load %arg2[%c102, %c0_13] : memref<160x128xf32, #tpu.memory_space<vmem>>, vector<1x96xf32>
    %c103 = arith.constant 103 : index
    %c0_14 = arith.constant 0 : index
    %10 = vector.load %arg2[%c103, %c0_14] : memref<160x128xf32, #tpu.memory_space<vmem>>, vector<1x32xf32>
    %c104 = arith.constant 104 : index
    %c0_15 = arith.constant 0 : index
    %11 = vector.load %arg2[%c104, %c0_15] : memref<160x128xf32, #tpu.memory_space<vmem>>, vector<1x32xf32>
    %c105 = arith.constant 105 : index
    %c0_16 = arith.constant 0 : index
    %12 = vector.load %arg2[%c105, %c0_16] : memref<160x128xf32, #tpu.memory_space<vmem>>, vector<1x32xf32>
    %c106 = arith.constant 106 : index
    %c0_17 = arith.constant 0 : index
    %13 = vector.load %arg2[%c106, %c0_17] : memref<160x128xf32, #tpu.memory_space<vmem>>, vector<1x64xf32>
    %c107 = arith.constant 107 : index
    %c0_18 = arith.constant 0 : index
    %14 = vector.load %arg2[%c107, %c0_18] : memref<160x128xf32, #tpu.memory_space<vmem>>, vector<1x32xf32>
    %c108 = arith.constant 108 : index
    %c0_19 = arith.constant 0 : index
    %15 = vector.load %arg2[%c108, %c0_19] : memref<160x128xf32, #tpu.memory_space<vmem>>, vector<1x32xf32>
    %c109 = arith.constant 109 : index
    %c0_20 = arith.constant 0 : index
    %16 = vector.load %arg2[%c109, %c0_20] : memref<160x128xf32, #tpu.memory_space<vmem>>, vector<1x32xf32>
    %c112 = arith.constant 112 : index
    %c0_21 = arith.constant 0 : index
    %17 = vector.load %arg2[%c112, %c0_21] : memref<160x128xf32, #tpu.memory_space<vmem>>, vector<16x16xf32>
    %c128 = arith.constant 128 : index
    %c0_22 = arith.constant 0 : index
    %18 = vector.load %arg2[%c128, %c0_22] : memref<160x128xf32, #tpu.memory_space<vmem>>, vector<16x16xf32>
    %c144 = arith.constant 144 : index
    %c0_23 = arith.constant 0 : index
    %19 = vector.load %arg2[%c144, %c0_23] : memref<160x128xf32, #tpu.memory_space<vmem>>, vector<16x1xf32>
    %cst = arith.constant dense<0.000000e+00> : vector<16xf32>
    %20 = vector.multi_reduction <add>, %0, %cst [1] : vector<16x32xf32> to vector<16xf32>
    %21 = vector.shape_cast %20 : vector<16xf32> to vector<16x1xf32>
    %cst_24 = arith.constant 3.200000e+01 : f32
    %22 = vector.broadcast %cst_24 : f32 to vector<16x1xf32>
    %23 = arith.divf %21, %22 : vector<16x1xf32>
    %24 = vector.broadcast %23 : vector<16x1xf32> to vector<16x32xf32>
    %25 = arith.subf %0, %24 : vector<16x32xf32>
    %26 = arith.mulf %25, %25 : vector<16x32xf32>
    %cst_25 = arith.constant dense<0.000000e+00> : vector<16xf32>
    %27 = vector.multi_reduction <add>, %26, %cst_25 [1] : vector<16x32xf32> to vector<16xf32>
    %28 = vector.shape_cast %27 : vector<16xf32> to vector<16x1xf32>
    %cst_26 = arith.constant 3.200000e+01 : f32
    %29 = vector.broadcast %cst_26 : f32 to vector<16x1xf32>
    %30 = arith.divf %28, %29 : vector<16x1xf32>
    %cst_27 = arith.constant 9.99999974E-6 : f32
    %31 = vector.broadcast %cst_27 : f32 to vector<16x1xf32>
    %32 = arith.addf %30, %31 : vector<16x1xf32>
    %33 = math.rsqrt %32 : vector<16x1xf32>
    %34 = vector.broadcast %33 : vector<16x1xf32> to vector<16x32xf32>
    %35 = arith.mulf %25, %34 : vector<16x32xf32>
    %36 = vector.broadcast %7 : vector<1x32xf32> to vector<16x32xf32>
    %37 = arith.mulf %35, %36 : vector<16x32xf32>
    %38 = vector.broadcast %8 : vector<1x32xf32> to vector<16x32xf32>
    %39 = arith.addf %37, %38 : vector<16x32xf32>
    %cst_28 = arith.constant dense<0.000000e+00> : vector<16x96xf32>
    %40 = tpu.matmul %39, %1, %cst_28 {dimension_numbers = #tpu.dot_dimension_numbers<[1], [0], [0], [1], [0, 0, 1, 1], [], []>} : vector<16x32xf32>, vector<32x96xf32>, vector<16x96xf32> -> vector<16x96xf32>
    %41 = vector.broadcast %9 : vector<1x96xf32> to vector<16x96xf32>
    %42 = arith.addf %40, %41 : vector<16x96xf32>
    %43 = vector.extract_strided_slice %42 {offsets = [0, 0], sizes = [16, 32], strides = [1, 1]} : vector<16x96xf32> to vector<16x32xf32>
    %44 = vector.extract_strided_slice %42 {offsets = [0, 32], sizes = [16, 32], strides = [1, 1]} : vector<16x96xf32> to vector<16x32xf32>
    %45 = vector.extract_strided_slice %42 {offsets = [0, 64], sizes = [16, 32], strides = [1, 1]} : vector<16x96xf32> to vector<16x32xf32>
    %cst_29 = arith.constant dense<0.000000e+00> : vector<16x32xf32>
    %46 = tpu.matmul %17, %43, %cst_29 {dimension_numbers = #tpu.dot_dimension_numbers<[1], [0], [0], [1], [0, 0, 1, 1], [], []>} : vector<16x16xf32>, vector<16x32xf32>, vector<16x32xf32> -> vector<16x32xf32>
    %cst_30 = arith.constant 0.353553385 : f32
    %47 = vector.broadcast %cst_30 : f32 to vector<16x32xf32>
    %48 = arith.mulf %46, %47 : vector<16x32xf32>
    %49 = arith.mulf %48, %44 : vector<16x32xf32>
    %cst_31 = arith.constant dense<0.000000e+00> : vector<16x4xf32>
    %50 = tpu.matmul %49, %5, %cst_31 {dimension_numbers = #tpu.dot_dimension_numbers<[1], [0], [0], [1], [0, 0, 1, 1], [], []>} : vector<16x32xf32>, vector<32x4xf32>, vector<16x4xf32> -> vector<16x4xf32>
    %51 = vector.extract_strided_slice %50 {offsets = [0, 0], sizes = [8, 4], strides = [1, 1]} : vector<16x4xf32> to vector<8x4xf32>
    %cst_32 = arith.constant dense<0xFF800000> : vector<4xf32>
    %52 = vector.multi_reduction <maximumf>, %51, %cst_32 [0] : vector<8x4xf32> to vector<4xf32>
    %53 = vector.shape_cast %52 : vector<4xf32> to vector<1x4xf32>
    %54 = vector.shape_cast %53 : vector<1x4xf32> to vector<1x4xf32>
    %55 = vector.broadcast %54 : vector<1x4xf32> to vector<8x4xf32>
    %56 = vector.extract_strided_slice %50 {offsets = [8, 0], sizes = [8, 4], strides = [1, 1]} : vector<16x4xf32> to vector<8x4xf32>
    %cst_33 = arith.constant dense<0xFF800000> : vector<4xf32>
    %57 = vector.multi_reduction <maximumf>, %56, %cst_33 [0] : vector<8x4xf32> to vector<4xf32>
    %58 = vector.shape_cast %57 : vector<4xf32> to vector<1x4xf32>
    %59 = vector.shape_cast %58 : vector<1x4xf32> to vector<1x4xf32>
    %60 = vector.broadcast %59 : vector<1x4xf32> to vector<8x4xf32>
    %61 = tpu.concatenate %55, %60 in 0 : vector<8x4xf32>, vector<8x4xf32> -> vector<16x4xf32>
    %62 = arith.subf %50, %61 : vector<16x4xf32>
    %63 = math.exp %62 : vector<16x4xf32>
    %cst_34 = arith.constant dense<0.000000e+00> : vector<16x4xf32>
    %64 = tpu.matmul %18, %63, %cst_34 {dimension_numbers = #tpu.dot_dimension_numbers<[1], [0], [0], [1], [0, 0, 1, 1], [], []>} : vector<16x16xf32>, vector<16x4xf32>, vector<16x4xf32> -> vector<16x4xf32>
    %65 = tpu.reciprocal %64 {approx = true} : vector<16x4xf32> -> vector<16x4xf32>
    %66 = arith.mulf %64, %65 : vector<16x4xf32>
    %cst_35 = arith.constant 2.000000e+00 : f32
    %67 = vector.broadcast %cst_35 : f32 to vector<16x4xf32>
    %68 = arith.subf %67, %66 : vector<16x4xf32>
    %69 = arith.mulf %65, %68 : vector<16x4xf32>
    %70 = arith.mulf %63, %69 : vector<16x4xf32>
    %cst_36 = arith.constant dense<0.000000e+00> : vector<16x32xf32>
    %71 = tpu.matmul %70, %6, %cst_36 {dimension_numbers = #tpu.dot_dimension_numbers<[1], [0], [0], [1], [0, 0, 1, 1], [], []>} : vector<16x4xf32>, vector<4x32xf32>, vector<16x32xf32> -> vector<16x32xf32>
    %72 = arith.mulf %71, %45 : vector<16x32xf32>
    %cst_37 = arith.constant dense<0.000000e+00> : vector<16x32xf32>
    %73 = tpu.matmul %18, %72, %cst_37 {dimension_numbers = #tpu.dot_dimension_numbers<[1], [0], [0], [1], [0, 0, 1, 1], [], []>} : vector<16x16xf32>, vector<16x32xf32>, vector<16x32xf32> -> vector<16x32xf32>
    %cst_38 = arith.constant dense<0.000000e+00> : vector<16x32xf32>
    %74 = tpu.matmul %73, %2, %cst_38 {dimension_numbers = #tpu.dot_dimension_numbers<[1], [0], [0], [1], [0, 0, 1, 1], [], []>} : vector<16x32xf32>, vector<32x32xf32>, vector<16x32xf32> -> vector<16x32xf32>
    %75 = vector.broadcast %10 : vector<1x32xf32> to vector<16x32xf32>
    %76 = arith.addf %74, %75 : vector<16x32xf32>
    %77 = vector.broadcast %15 : vector<1x32xf32> to vector<16x32xf32>
    %78 = arith.mulf %77, %76 : vector<16x32xf32>
    %79 = arith.addf %0, %78 : vector<16x32xf32>
    %cst_39 = arith.constant dense<0.000000e+00> : vector<16xf32>
    %80 = vector.multi_reduction <add>, %79, %cst_39 [1] : vector<16x32xf32> to vector<16xf32>
    %81 = vector.shape_cast %80 : vector<16xf32> to vector<16x1xf32>
    %cst_40 = arith.constant 3.200000e+01 : f32
    %82 = vector.broadcast %cst_40 : f32 to vector<16x1xf32>
    %83 = arith.divf %81, %82 : vector<16x1xf32>
    %84 = vector.broadcast %83 : vector<16x1xf32> to vector<16x32xf32>
    %85 = arith.subf %79, %84 : vector<16x32xf32>
    %86 = arith.mulf %85, %85 : vector<16x32xf32>
    %cst_41 = arith.constant dense<0.000000e+00> : vector<16xf32>
    %87 = vector.multi_reduction <add>, %86, %cst_41 [1] : vector<16x32xf32> to vector<16xf32>
    %88 = vector.shape_cast %87 : vector<16xf32> to vector<16x1xf32>
    %cst_42 = arith.constant 3.200000e+01 : f32
    %89 = vector.broadcast %cst_42 : f32 to vector<16x1xf32>
    %90 = arith.divf %88, %89 : vector<16x1xf32>
    %cst_43 = arith.constant 9.99999974E-6 : f32
    %91 = vector.broadcast %cst_43 : f32 to vector<16x1xf32>
    %92 = arith.addf %90, %91 : vector<16x1xf32>
    %93 = math.rsqrt %92 : vector<16x1xf32>
    %94 = vector.broadcast %93 : vector<16x1xf32> to vector<16x32xf32>
    %95 = arith.mulf %85, %94 : vector<16x32xf32>
    %96 = vector.broadcast %11 : vector<1x32xf32> to vector<16x32xf32>
    %97 = arith.mulf %95, %96 : vector<16x32xf32>
    %98 = vector.broadcast %12 : vector<1x32xf32> to vector<16x32xf32>
    %99 = arith.addf %97, %98 : vector<16x32xf32>
    %cst_44 = arith.constant dense<0.000000e+00> : vector<16x64xf32>
    %100 = tpu.matmul %99, %3, %cst_44 {dimension_numbers = #tpu.dot_dimension_numbers<[1], [0], [0], [1], [0, 0, 1, 1], [], []>} : vector<16x32xf32>, vector<32x64xf32>, vector<16x64xf32> -> vector<16x64xf32>
    %101 = vector.broadcast %13 : vector<1x64xf32> to vector<16x64xf32>
    %102 = arith.addf %100, %101 : vector<16x64xf32>
    %cst_45 = arith.constant 5.000000e-01 : f32
    %103 = vector.broadcast %cst_45 : f32 to vector<16x64xf32>
    %104 = arith.mulf %103, %102 : vector<16x64xf32>
    %cst_46 = arith.constant 0.707106769 : f32
    %105 = vector.broadcast %cst_46 : f32 to vector<16x64xf32>
    %106 = arith.mulf %102, %105 : vector<16x64xf32>
    %107 = math.absf %106 : vector<16x64xf32>
    %cst_47 = arith.constant 0.327591091 : f32
    %108 = vector.broadcast %cst_47 : f32 to vector<16x64xf32>
    %109 = arith.mulf %108, %107 : vector<16x64xf32>
    %cst_48 = arith.constant 1.000000e+00 : f32
    %110 = vector.broadcast %cst_48 : f32 to vector<16x64xf32>
    %111 = arith.addf %110, %109 : vector<16x64xf32>
    %cst_49 = arith.constant 1.000000e+00 : f32
    %112 = vector.broadcast %cst_49 : f32 to vector<16x64xf32>
    %113 = arith.divf %112, %111 : vector<16x64xf32>
    %cst_50 = arith.constant 1.06140542 : f32
    %114 = vector.broadcast %cst_50 : f32 to vector<16x64xf32>
    %115 = arith.mulf %114, %113 : vector<16x64xf32>
    %cst_51 = arith.constant -1.45315206 : f32
    %116 = vector.broadcast %cst_51 : f32 to vector<16x64xf32>
    %117 = arith.addf %115, %116 : vector<16x64xf32>
    %118 = arith.mulf %117, %113 : vector<16x64xf32>
    %cst_52 = arith.constant 1.42141378 : f32
    %119 = vector.broadcast %cst_52 : f32 to vector<16x64xf32>
    %120 = arith.addf %118, %119 : vector<16x64xf32>
    %121 = arith.mulf %120, %113 : vector<16x64xf32>
    %cst_53 = arith.constant -0.284496725 : f32
    %122 = vector.broadcast %cst_53 : f32 to vector<16x64xf32>
    %123 = arith.addf %121, %122 : vector<16x64xf32>
    %124 = arith.mulf %123, %113 : vector<16x64xf32>
    %cst_54 = arith.constant 0.254829586 : f32
    %125 = vector.broadcast %cst_54 : f32 to vector<16x64xf32>
    %126 = arith.addf %124, %125 : vector<16x64xf32>
    %127 = arith.mulf %126, %113 : vector<16x64xf32>
    %cst_55 = arith.constant 0.000000e+00 : f32
    %128 = vector.broadcast %cst_55 : f32 to vector<16x64xf32>
    %129 = arith.subf %128, %107 : vector<16x64xf32>
    %130 = arith.mulf %129, %107 : vector<16x64xf32>
    %131 = math.exp %130 : vector<16x64xf32>
    %132 = arith.mulf %127, %131 : vector<16x64xf32>
    %cst_56 = arith.constant 1.000000e+00 : f32
    %133 = vector.broadcast %cst_56 : f32 to vector<16x64xf32>
    %134 = arith.subf %133, %132 : vector<16x64xf32>
    %cst_57 = arith.constant 0.000000e+00 : f32
    %135 = vector.broadcast %cst_57 : f32 to vector<16x64xf32>
    %136 = arith.cmpf olt, %106, %135 : vector<16x64xf32>
    %cst_58 = arith.constant 0.000000e+00 : f32
    %137 = vector.broadcast %cst_58 : f32 to vector<16x64xf32>
    %138 = arith.subf %137, %134 : vector<16x64xf32>
    %139 = arith.select %136, %138, %134 : vector<16x64xi1>, vector<16x64xf32>
    %cst_59 = arith.constant 1.000000e+00 : f32
    %140 = vector.broadcast %cst_59 : f32 to vector<16x64xf32>
    %141 = arith.addf %140, %139 : vector<16x64xf32>
    %142 = arith.mulf %104, %141 : vector<16x64xf32>
    %cst_60 = arith.constant dense<0.000000e+00> : vector<16x32xf32>
    %143 = tpu.matmul %142, %4, %cst_60 {dimension_numbers = #tpu.dot_dimension_numbers<[1], [0], [0], [1], [0, 0, 1, 1], [], []>} : vector<16x64xf32>, vector<64x32xf32>, vector<16x32xf32> -> vector<16x32xf32>
    %144 = vector.broadcast %14 : vector<1x32xf32> to vector<16x32xf32>
    %145 = arith.addf %143, %144 : vector<16x32xf32>
    %146 = vector.broadcast %16 : vector<1x32xf32> to vector<16x32xf32>
    %147 = arith.mulf %146, %145 : vector<16x32xf32>
    %148 = arith.addf %99, %147 : vector<16x32xf32>
    %149 = vector.broadcast %15 : vector<1x32xf32> to vector<16x32xf32>
    %150 = arith.mulf %149, %39 : vector<16x32xf32>
    %151 = arith.addf %0, %150 : vector<16x32xf32>
    %cst_61 = arith.constant 2.000000e+00 : f32
    %152 = vector.broadcast %cst_61 : f32 to vector<16x32xf32>
    %153 = arith.mulf %152, %151 : vector<16x32xf32>
    %cst_62 = arith.constant 5.000000e-01 : f32
    %154 = vector.broadcast %cst_62 : f32 to vector<16x1xf32>
    %155 = arith.cmpf ogt, %19, %154 : vector<16x1xf32>
    %156 = vector.shape_cast %155 : vector<16x1xi1> to vector<16x1xi1>
    %157 = vector.broadcast %156 : vector<16x1xi1> to vector<16x32xi1>
    %158 = arith.select %157, %148, %153 : vector<16x32xi1>, vector<16x32xf32>
    %c0_63 = arith.constant 0 : index
    %c0_64 = arith.constant 0 : index
    %159 = vector.load %arg3[%c0_63, %c0_64] : memref<16x32xf32, #tpu.memory_space<vmem>>, vector<16x32xf32>
    tpu.vector_store %arg3[%c0_63, %c0_64], %158 {strides = array<i32>} : memref<16x32xf32, #tpu.memory_space<vmem>>, vector<16x32xf32>,
    return
  }
  func.func @transform_0(%arg0: i32) -> (i32, i32) {
    %c0_i32 = arith.constant 0 : i32
    %c0_i32_0 = arith.constant 0 : i32
    return %arg0, %c0_i32 : i32, i32
  }
  func.func @transform_1(%arg0: i32) -> (i32, i32) {
    %c0_i32 = arith.constant 0 : i32
    %c0_i32_0 = arith.constant 0 : i32
    %c0_i32_1 = arith.constant 0 : i32
    return %c0_i32, %c0_i32_0 : i32, i32
  }
  func.func @transform_2(%arg0: i32) -> (i32, i32) {
    %c0_i32 = arith.constant 0 : i32
    %c0_i32_0 = arith.constant 0 : i32
    return %arg0, %c0_i32 : i32, i32
  }
}

</mosaic_0001>

<llo_original>
// kernel: class_attention_block.1
$region0: #{class_attention_block.1}
  #allocation0 [shape = 'u32[]', space=smem, size = 0x4, offset = 0x4, fixed_abs, tag = 'smem constant byte address 0x4 - core index']
  #allocation1 [shape = 'u32[144,128]{1,0:T(1,128)}', space=vmem, size = 0x12000, scoped, tag = 'internal scratch']
  %s0 = inlined_call_operand.hbm [shape: f32[16,32], index: 0, kind: input, shape index: {}]
  %s1 = inlined_call_operand.hbm [shape: f32[160,128], index: 1, kind: input, shape index: {}]
  %s2 = inlined_call_operand.hbm [shape: f32[16,32], index: 2, kind: output, shape index: {}]
  %s3 = sld [smem:[#allocation0]]
  $region26: #{class_attention_block.1} parent=0
    _
  %s5 = ssub.s32 1, %s3
  %s6 = scalar_select 0, %s5, %s3
  $region1: #{class_attention_block.1} parent=0
    #allocation2 [shape = 'u8[8192]{0}', space=vmem, size = 0x2000, scoped, tag = 'input window, operand 0, single buffered']
    #allocation3 [shape = 's32[1]{0}', space=sflag, size = 0x4, scoped, tag = 'scoped memory for class_attention_block.1']
    #allocation4 [shape = 's32[1]{0}', space=sflag, size = 0x4, scoped, tag = 'scoped memory for class_attention_block.1']
    #allocation5 [shape = 'u8[81920]{0}', space=vmem, size = 0x14000, scoped, tag = 'input window, operand 1, single buffered']
    #allocation6 [shape = 's32[1]{0}', space=sflag, size = 0x4, scoped, tag = 'scoped memory for class_attention_block.1']
    #allocation7 [shape = 'u8[8192]{0}', space=vmem, size = 0x2000, scoped, tag = 'output window, operand 0, single buffered']
    %7 = vsyncpa [#allocation3], 0
    %8 = vsyncpa [#allocation6], 0
    %9 = vsyncpa [#allocation4], 0
    // Predicated region
    $region2: #{class_attention_block.1} parent=1 // pred_check
      _
    $region3: #{class_attention_block.1} parent=1 // pred_check_branch
      %11 = sbr.rel (0) target = $region5
    $region4: #{class_attention_block.1} parent=1 // pred_region
      %s13 = ssub.s32 256, 256
      %14 = vsyncadd [#allocation3], %s13
      %s15 = sshll.u32 [#allocation2], 4
      %s16 = int_to_ptr.vmem [resolvable:$true] %s15
      %21 = dma.hbm_to_vmem [thread:$0]  %s0, 256, %s16, [#allocation3], 128, 128, 8
    $region5: #{class_attention_block.1} parent=1 // pred_fallthru
      _
    // Predicated region
    $region6: #{class_attention_block.1} parent=1 // pred_check
      _
    $region7: #{class_attention_block.1} parent=1 // pred_check_branch
      %23 = sbr.rel (0) target = $region9
    $region8: #{class_attention_block.1} parent=1 // pred_region
      %s25 = ssub.s32 2560, 2560
      %26 = vsyncadd [#allocation6], %s25
      %s27 = sshll.u32 [#allocation5], 4
      %s28 = int_to_ptr.vmem [resolvable:$true] %s27
      %33 = dma.hbm_to_vmem [thread:$0]  %s1, 2560, %s28, [#allocation6], 128, 128, 8
    $region9: #{class_attention_block.1} parent=1 // pred_fallthru
      _
    // Predicated region
    $region10: #{class_attention_block.1} parent=1 // pred_check
      _
    $region11: #{class_attention_block.1} parent=1 // pred_check_branch
      %35 = sbr.rel (0) target = $region13
    $region12: #{class_attention_block.1} parent=1 // pred_region
      %36 = dma.done [#allocation3], 256
    $region13: #{class_attention_block.1} parent=1 // pred_fallthru
      _
    // Predicated region
    $region14: #{class_attention_block.1} parent=1 // pred_check
      _
    $region15: #{class_attention_block.1} parent=1 // pred_check_branch
      %38 = sbr.rel (0) target = $region17
    $region16: #{class_attention_block.1} parent=1 // pred_region
      %39 = dma.done [#allocation6], 2560
    $region17: #{class_attention_block.1} parent=1 // pred_fallthru
      _
    %v40 = vld [vmem:[#allocation2] sm:$0xff]
    %v41 = vld [vmem:[#allocation2 + $0x8] sm:$0xff]
    %v42 = vld [vmem:[#allocation5] sm:$0xff]
    %v43 = vld [vmem:[#allocation5 + $0x8] sm:$0xff]
    %v44 = vld [vmem:[#allocation5 + $0x10] sm:$0xff]
    %v45 = vld [vmem:[#allocation5 + $0x18] sm:$0xff]
    %v46 = vld [vmem:[#allocation5 + $0x20] sm:$0xff]
    %v47 = vld [vmem:[#allocation5 + $0x28] sm:$0xff]
    %v48 = vld [vmem:[#allocation5 + $0x30] sm:$0xff]
    %v49 = vld [vmem:[#allocation5 + $0x38] sm:$0xff]
    %v50 = vld [vmem:[#allocation5 + $0x40] sm:$0xff]
    %v51 = vld [vmem:[#allocation5 + $0x48] sm:$0xff]
    %v52 = vld [vmem:[#allocation5 + $0x50] sm:$0xff]
    %v53 = vld [vmem:[#allocation5 + $0x58] sm:$0xff]
    %v54 = vld [vmem:[#allocation5 + $0x60] sm:$0xf]
    %v55 = vld [vmem:[#allocation5 + $0x64] sm:$0x1]
    %v56 = vld [vmem:[#allocation5 + $0x65] sm:$0x1]
    %v57 = vld [vmem:[#allocation5 + $0x66] sm:$0x1]
    %v58 = vld [vmem:[#allocation5 + $0x67] sm:$0x1]
    %v59 = vld [vmem:[#allocation5 + $0x68] sm:$0x1]
    %v60 = vld [vmem:[#allocation5 + $0x69] sm:$0x1]
    %v61 = vld [vmem:[#allocation5 + $0x6a] sm:$0x1]
    %v62 = vld [vmem:[#allocation5 + $0x6b] sm:$0x1]
    %v63 = vld [vmem:[#allocation5 + $0x6c] sm:$0x1]
    %v64 = vld [vmem:[#allocation5 + $0x6d] sm:$0x1]
    %v65 = vld [vmem:[#allocation5 + $0x70] sm:$0xff]
    %v66 = vld [vmem:[#allocation5 + $0x78] sm:$0xff]
    %v67 = vld [vmem:[#allocation5 + $0x80] sm:$0xff]
    %v68 = vld [vmem:[#allocation5 + $0x88] sm:$0xff]
    %v69 = vld [vmem:[#allocation5 + $0x90] sm:$0xff]
    %v70 = vld [vmem:[#allocation5 + $0x98] sm:$0xff]
    %vm71 = vcmask 261120
    %v72 = vsel %vm71, %v40, 0.0
    %73 = vadd.xlane.f32.xlu0 %v72
    %v74 = vpop.xlane.xlu0 %73
    %v75 = vsel %vm71, %v41, 0.0
    %76 = vadd.xlane.f32.xlu0 %v75
    %v77 = vpop.xlane.xlu0 %76
    %v78 = vrcp.pop 32.0
    %v79 = vmul.f32 %v74, %v78
    %v80 = vmul.f32 %v77, %v78
    %v81 = vsub.f32 %v40, %v79
    %v82 = vsub.f32 %v41, %v80
    %v83 = vmul.f32 %v81, %v81
    %v84 = vmul.f32 %v82, %v82
    %v85 = vsel %vm71, %v83, 0.0
    %86 = vadd.xlane.f32.xlu0 %v85
    %v87 = vpop.xlane.xlu0 %86
    %v88 = vsel %vm71, %v84, 0.0
    %89 = vadd.xlane.f32.xlu0 %v88
    %v90 = vpop.xlane.xlu0 %89
    %v91 = vmul.f32 %v87, %v78
    %v92 = vmul.f32 %v90, %v78
    %v93 = vadd.f32 %v91, 1e-05
    %v94 = vadd.f32 %v92, 1e-05
    %v95 = vrsqrt.pop %v93
    %v96 = vrsqrt.pop %v94
    %v97 = vmul.f32 %v81, %v95
    %v98 = vmul.f32 %v82, %v96
    %v99 = vlaneseq
    %v100 = vshrl.u32 %v99, 7
    %v101 = vsub.s32 0, %v100
    %v102 = vrot.slane %v55, %v101
    %v103 = vmul.f32 %v97, %v102
    %v104 = vmul.f32 %v98, %v102
    %v105 = vlaneseq
    %v106 = vshrl.u32 %v105, 7
    %v107 = vsub.s32 0, %v106
    %v108 = vrot.slane %v56, %v107
    %v109 = vadd.f32 %v103, %v108
    %v110 = vadd.f32 %v104, %v108
    %v111 = vlaneseq
    %v112 = vshrl.u32 %v111, 7
    %v113 = vsub.s32 0, %v112
    %v114 = vrot.slane %v57, %v113
    %v116 = vsel %vm71, %v109, 0
    %v119 = vsel %vm71, %v110, 0
    %121 = vmatprep.subr.mxu0 0.0
    %122 = vmatpush1.msra.mxu0 %v42
    %123 = vmatprep.subr.mxu0 0.0
    %124 = vmatpush1.msra.mxu0 %v43
    %125 = vmatprep.subr.mxu0 0.0
    %126 = vmatpush1.msra.mxu0 %v44
    %127 = vmatprep.subr.mxu0 0.0
    %128 = vmatpush1.msra.mxu0 %v45
    %129 = vmatprep.subr.mxu0 0.0
    %130 = vmatpush1.msra.mxu0 0.0
    %131 = vmatprep.subr.mxu0 0.0
    %132 = vmatpush1.msra.mxu0 0.0
    %133 = vmatprep.subr.mxu0 0.0
    %134 = vmatpush1.msra.mxu0 0.0
    %135 = vmatprep.subr.mxu0 0.0
    %136 = vmatpush1.msra.mxu0 0.0
    %137 = vmatprep.subr.mxu0 0.0
    %138 = vmatpush1.msra.mxu0 0.0
    %139 = vmatprep.subr.mxu0 0.0
    %140 = vmatpush1.msra.mxu0 0.0
    %141 = vmatprep.subr.mxu0 0.0
    %142 = vmatpush1.msra.mxu0 0.0
    %143 = vmatprep.subr.mxu0 0.0
    %144 = vmatpush1.msra.mxu0 0.0
    %145 = vmatprep.subr.mxu0 0.0
    %146 = vmatpush1.msra.mxu0 0.0
    %147 = vmatprep.subr.mxu0 0.0
    %148 = vmatpush1.msra.mxu0 0.0
    %149 = vmatprep.subr.mxu0 0.0
    %150 = vmatpush1.msra.mxu0 0.0
    %151 = vmatprep.subr.mxu0 0.0
    %152 = vmatpush1.msra.mxu0 0.0
    %153 = vmatprep.subr.mxu0 0.0
    %154 = vmatpush1.msra.mxu0 0.0
    %155 = vmatprep.subr.mxu0 0.0
    %156 = vmatpush1.msra.mxu0 0.0
    %157 = vmatprep.subr.mxu0 0.0
    %158 = vmatpush1.msra.mxu0 0.0
    %159 = vmatprep.subr.mxu0 0.0
    %160 = vmatpush1.msra.mxu0 0.0
    %161 = vmatprep.subr.mxu0 0.0
    %162 = vmatpush1.msra.mxu0 0.0
    %163 = vmatprep.subr.mxu0 0.0
    %164 = vmatpush1.msra.mxu0 0.0
    %165 = vmatprep.subr.mxu0 0.0
    %166 = vmatpush1.msra.mxu0 0.0
    %167 = vmatprep.subr.mxu0 0.0
    %168 = vmatpush1.msra.mxu0 0.0
    %169 = vmatprep.subr.mxu0 0.0
    %170 = vmatpush1.msra.mxu0 0.0
    %171 = vmatprep.subr.mxu0 0.0
    %172 = vmatpush1.msra.mxu0 0.0
    %173 = vmatprep.subr.mxu0 0.0
    %174 = vmatpush1.msra.mxu0 0.0
    %175 = vmatprep.subr.mxu0 0.0
    %176 = vmatpush1.msra.mxu0 0.0
    %177 = vmatprep.subr.mxu0 0.0
    %178 = vmatpush1.msra.mxu0 0.0
    %179 = vmatprep.subr.mxu0 0.0
    %180 = vmatpush1.msra.mxu0 0.0
    %181 = vmatprep.subr.mxu0 0.0
    %182 = vmatpush1.msra.mxu0 0.0
    %183 = vmatprep.subr.mxu0 0.0
    %184 = vmatpush1.msra.mxu0 0.0
    %185 = vmatprep.mubr.f32.mxu0 0.0
    %186 = vmatmul.mubr.f32.gmra.mrb[0].mxu0 %v116
    %v187 = vpop.f32.mrb[0].mxu0
    %v188 = vadd.f32 %v114, %v187
    %v189 = vpop.f32.mrb[0].mxu0
    %190 = vmatprep.mubr.f32.mxu0 0.0
    %191 = vmatmul.mubr.f32.gmra.mrb[0].mxu0 %v119
    %v192 = vpop.f32.mrb[0].mxu0
    %v193 = vadd.f32 %v114, %v192
    %v194 = vpop.f32.mrb[0].mxu0
    %195 = vdwg.mxu0
    %vm196 = vcmask 130048
    %v198 = vsel %vm196, %v65, 0
    %v201 = vsel %vm196, %v66, 0
    %203 = vmatprep.subr.mxu0 0.0
    %204 = vmatpush1.msra.mxu0 %v188
    %205 = vmatprep.subr.mxu0 0.0
    %206 = vmatpush1.msra.mxu0 %v193
    %207 = vmatprep.subr.mxu0 0.0
    %208 = vmatpush1.msra.mxu0 0.0
    %209 = vmatprep.subr.mxu0 0.0
    %210 = vmatpush1.msra.mxu0 0.0
    %211 = vmatprep.subr.mxu0 0.0
    %212 = vmatpush1.msra.mxu0 0.0
    %213 = vmatprep.subr.mxu0 0.0
    %214 = vmatpush1.msra.mxu0 0.0
    %215 = vmatprep.subr.mxu0 0.0
    %216 = vmatpush1.msra.mxu0 0.0
    %217 = vmatprep.subr.mxu0 0.0
    %218 = vmatpush1.msra.mxu0 0.0
    %219 = vmatprep.subr.mxu0 0.0
    %220 = vmatpush1.msra.mxu0 0.0
    %221 = vmatprep.subr.mxu0 0.0
    %222 = vmatpush1.msra.mxu0 0.0
    %223 = vmatprep.subr.mxu0 0.0
    %224 = vmatpush1.msra.mxu0 0.0
    %225 = vmatprep.subr.mxu0 0.0
    %226 = vmatpush1.msra.mxu0 0.0
    %227 = vmatprep.subr.mxu0 0.0
    %228 = vmatpush1.msra.mxu0 0.0
    %229 = vmatprep.subr.mxu0 0.0
    %230 = vmatpush1.msra.mxu0 0.0
    %231 = vmatprep.subr.mxu0 0.0
    %232 = vmatpush1.msra.mxu0 0.0
    %233 = vmatprep.subr.mxu0 0.0
    %234 = vmatpush1.msra.mxu0 0.0
    %235 = vmatprep.subr.mxu0 0.0
    %236 = vmatpush1.msra.mxu0 0.0
    %237 = vmatprep.subr.mxu0 0.0
    %238 = vmatpush1.msra.mxu0 0.0
    %239 = vmatprep.subr.mxu0 0.0
    %240 = vmatpush1.msra.mxu0 0.0
    %241 = vmatprep.subr.mxu0 0.0
    %242 = vmatpush1.msra.mxu0 0.0
    %243 = vmatprep.subr.mxu0 0.0
    %244 = vmatpush1.msra.mxu0 0.0
    %245 = vmatprep.subr.mxu0 0.0
    %246 = vmatpush1.msra.mxu0 0.0
    %247 = vmatprep.subr.mxu0 0.0
    %248 = vmatpush1.msra.mxu0 0.0
    %249 = vmatprep.subr.mxu0 0.0
    %250 = vmatpush1.msra.mxu0 0.0
    %251 = vmatprep.subr.mxu0 0.0
    %252 = vmatpush1.msra.mxu0 0.0
    %253 = vmatprep.subr.mxu0 0.0
    %254 = vmatpush1.msra.mxu0 0.0
    %255 = vmatprep.subr.mxu0 0.0
    %256 = vmatpush1.msra.mxu0 0.0
    %257 = vmatprep.subr.mxu0 0.0
    %258 = vmatpush1.msra.mxu0 0.0
    %259 = vmatprep.subr.mxu0 0.0
    %260 = vmatpush1.msra.mxu0 0.0
    %261 = vmatprep.subr.mxu0 0.0
    %262 = vmatpush1.msra.mxu0 0.0
    %263 = vmatprep.subr.mxu0 0.0
    %264 = vmatpush1.msra.mxu0 0.0
    %265 = vmatprep.subr.mxu0 0.0
    %266 = vmatpush1.msra.mxu0 0.0
    %267 = vmatprep.mubr.f32.mxu0 0.0
    %268 = vmatmul.mubr.f32.gmra.mrb[0].mxu0 %v198
    %v269 = vpop.f32.mrb[0].mxu0
    %v270 = vadd.f32 0.0, %v269
    %v271 = vpop.f32.mrb[0].mxu0
    %272 = vmatprep.mubr.f32.mxu0 0.0
    %273 = vmatmul.mubr.f32.gmra.mrb[0].mxu0 %v201
    %v274 = vpop.f32.mrb[0].mxu0
    %v275 = vadd.f32 0.0, %v274
    %v276 = vpop.f32.mrb[0].mxu0
    %277 = vdwg.mxu0
    %v278 = vmul.f32 %v270, 0.35355338
    %v279 = vmul.f32 %v275, 0.35355338
    %282 = vrot.lane.b32.xlu0 %v188, 96
    %v283 = vpop.permute.xlu0 %282
    %284 = vrot.lane.b32.xlu0 %v193, 96
    %v285 = vpop.permute.xlu0 %284
    %v288 = vmul.f32 %v278, %v283
    %v289 = vmul.f32 %v279, %v285
    %294 = vrot.lane.b32.xlu0 %v46, 32
    %v295 = vpop.permute.xlu0 %294
    %296 = vrot.lane.b32.xlu0 %v47, 32
    %v297 = vpop.permute.xlu0 %296
    %298 = vrot.lane.b32.xlu0 %v48, 32
    %v299 = vpop.permute.xlu0 %298
    %300 = vrot.lane.b32.xlu0 %v49, 32
    %v301 = vpop.permute.xlu0 %300
    %v307 = vsel %vm71, %v288, 0
    %v310 = vsel %vm71, %v289, 0
    %312 = vmatprep.subr.mxu0 0.0
    %313 = vmatpush1.msra.mxu0 %v295
    %314 = vmatprep.subr.mxu0 0.0
    %315 = vmatpush1.msra.mxu0 %v297
    %316 = vmatprep.subr.mxu0 0.0
    %317 = vmatpush1.msra.mxu0 %v299
    %318 = vmatprep.subr.mxu0 0.0
    %319 = vmatpush1.msra.mxu0 %v301
    %320 = vmatprep.subr.mxu0 0.0
    %321 = vmatpush1.msra.mxu0 0.0
    %322 = vmatprep.subr.mxu0 0.0
    %323 = vmatpush1.msra.mxu0 0.0
    %324 = vmatprep.subr.mxu0 0.0
    %325 = vmatpush1.msra.mxu0 0.0
    %326 = vmatprep.subr.mxu0 0.0
    %327 = vmatpush1.msra.mxu0 0.0
    %328 = vmatprep.subr.mxu0 0.0
    %329 = vmatpush1.msra.mxu0 0.0
    %330 = vmatprep.subr.mxu0 0.0
    %331 = vmatpush1.msra.mxu0 0.0
    %332 = vmatprep.subr.mxu0 0.0
    %333 = vmatpush1.msra.mxu0 0.0
    %334 = vmatprep.subr.mxu0 0.0
    %335 = vmatpush1.msra.mxu0 0.0
    %336 = vmatprep.subr.mxu0 0.0
    %337 = vmatpush1.msra.mxu0 0.0
    %338 = vmatprep.subr.mxu0 0.0
    %339 = vmatpush1.msra.mxu0 0.0
    %340 = vmatprep.subr.mxu0 0.0
    %341 = vmatpush1.msra.mxu0 0.0
    %342 = vmatprep.subr.mxu0 0.0
    %343 = vmatpush1.msra.mxu0 0.0
    %344 = vmatprep.subr.mxu0 0.0
    %345 = vmatpush1.msra.mxu0 0.0
    %346 = vmatprep.subr.mxu0 0.0
    %347 = vmatpush1.msra.mxu0 0.0
    %348 = vmatprep.subr.mxu0 0.0
    %349 = vmatpush1.msra.mxu0 0.0
    %350 = vmatprep.subr.mxu0 0.0
    %351 = vmatpush1.msra.mxu0 0.0
    %352 = vmatprep.subr.mxu0 0.0
    %353 = vmatpush1.msra.mxu0 0.0
    %354 = vmatprep.subr.mxu0 0.0
    %355 = vmatpush1.msra.mxu0 0.0
    %356 = vmatprep.subr.mxu0 0.0
    %357 = vmatpush1.msra.mxu0 0.0
    %358 = vmatprep.subr.mxu0 0.0
    %359 = vmatpush1.msra.mxu0 0.0
    %360 = vmatprep.subr.mxu0 0.0
    %361 = vmatpush1.msra.mxu0 0.0
    %362 = vmatprep.subr.mxu0 0.0
    %363 = vmatpush1.msra.mxu0 0.0
    %364 = vmatprep.subr.mxu0 0.0
    %365 = vmatpush1.msra.mxu0 0.0
    %366 = vmatprep.subr.mxu0 0.0
    %367 = vmatpush1.msra.mxu0 0.0
    %368 = vmatprep.subr.mxu0 0.0
    %369 = vmatpush1.msra.mxu0 0.0
    %370 = vmatprep.subr.mxu0 0.0
    %371 = vmatpush1.msra.mxu0 0.0
    %372 = vmatprep.subr.mxu0 0.0
    %373 = vmatpush1.msra.mxu0 0.0
    %374 = vmatprep.subr.mxu0 0.0
    %375 = vmatpush1.msra.mxu0 0.0
    %376 = vmatprep.mubr.f32.mxu0 0.0
    %377 = vmatmul.mubr.f32.gmra.mrb[0].mxu0 %v307
    %v378 = vpop.f32.mrb[0].mxu0
    %v379 = vadd.f32 0.0, %v378
    %v380 = vpop.f32.mrb[0].mxu0
    %381 = vmatprep.mubr.f32.mxu0 0.0
    %382 = vmatmul.mubr.f32.gmra.mrb[0].mxu0 %v310
    %v383 = vpop.f32.mrb[0].mxu0
    %v384 = vadd.f32 0.0, %v383
    %v385 = vpop.f32.mrb[0].mxu0
    %386 = vdwg.mxu0
    %vm387 = vcmask 31744
    %v388 = vsel %vm387, %v379, -inf
    %v389 = vrot.slane %v388, 4
    %v390 = vmax.f32 %v388, %v389
    %v391 = vrot.slane %v390, 2
    %v392 = vmax.f32 %v390, %v391
    %v393 = vrot.slane %v392, 1
    %v394 = vmax.f32 %v392, %v393
    %v395 = vsel %vm387, %v384, -inf
    %v396 = vrot.slane %v395, 4
    %v397 = vmax.f32 %v395, %v396
    %v398 = vrot.slane %v397, 2
    %v399 = vmax.f32 %v397, %v398
    %v400 = vrot.slane %v399, 1
    %v401 = vmax.f32 %v399, %v400
    %v402 = vsub.f32 %v379, %v394
    %v403 = vsub.f32 %v384, %v401
    %v404 = vmul.f32 %v402, 1.442695
    %v405 = vpow.pop %v404
    %v406 = vmul.f32 %v403, 1.442695
    %v407 = vpow.pop %v406
    %v409 = vsel %vm196, %v67, 0
    %v412 = vsel %vm196, %v68, 0
    %414 = vmatprep.subr.mxu0 0.0
    %415 = vmatpush1.msra.mxu0 %v405
    %416 = vmatprep.subr.mxu0 0.0
    %417 = vmatpush1.msra.mxu0 %v407
    %418 = vmatprep.subr.mxu0 0.0
    %419 = vmatpush1.msra.mxu0 0.0
    %420 = vmatprep.subr.mxu0 0.0
    %421 = vmatpush1.msra.mxu0 0.0
    %422 = vmatprep.subr.mxu0 0.0
    %423 = vmatpush1.msra.mxu0 0.0
    %424 = vmatprep.subr.mxu0 0.0
    %425 = vmatpush1.msra.mxu0 0.0
    %426 = vmatprep.subr.mxu0 0.0
    %427 = vmatpush1.msra.mxu0 0.0
    %428 = vmatprep.subr.mxu0 0.0
    %429 = vmatpush1.msra.mxu0 0.0
    %430 = vmatprep.subr.mxu0 0.0
    %431 = vmatpush1.msra.mxu0 0.0
    %432 = vmatprep.subr.mxu0 0.0
    %433 = vmatpush1.msra.mxu0 0.0
    %434 = vmatprep.subr.mxu0 0.0
    %435 = vmatpush1.msra.mxu0 0.0
    %436 = vmatprep.subr.mxu0 0.0
    %437 = vmatpush1.msra.mxu0 0.0
    %438 = vmatprep.subr.mxu0 0.0
    %439 = vmatpush1.msra.mxu0 0.0
    %440 = vmatprep.subr.mxu0 0.0
    %441 = vmatpush1.msra.mxu0 0.0
    %442 = vmatprep.subr.mxu0 0.0
    %443 = vmatpush1.msra.mxu0 0.0
    %444 = vmatprep.subr.mxu0 0.0
    %445 = vmatpush1.msra.mxu0 0.0
    %446 = vmatprep.subr.mxu0 0.0
    %447 = vmatpush1.msra.mxu0 0.0
    %448 = vmatprep.subr.mxu0 0.0
    %449 = vmatpush1.msra.mxu0 0.0
    %450 = vmatprep.subr.mxu0 0.0
    %451 = vmatpush1.msra.mxu0 0.0
    %452 = vmatprep.subr.mxu0 0.0
    %453 = vmatpush1.msra.mxu0 0.0
    %454 = vmatprep.subr.mxu0 0.0
    %455 = vmatpush1.msra.mxu0 0.0
    %456 = vmatprep.subr.mxu0 0.0
    %457 = vmatpush1.msra.mxu0 0.0
    %458 = vmatprep.subr.mxu0 0.0
    %459 = vmatpush1.msra.mxu0 0.0
    %460 = vmatprep.subr.mxu0 0.0
    %461 = vmatpush1.msra.mxu0 0.0
    %462 = vmatprep.subr.mxu0 0.0
    %463 = vmatpush1.msra.mxu0 0.0
    %464 = vmatprep.subr.mxu0 0.0
    %465 = vmatpush1.msra.mxu0 0.0
    %466 = vmatprep.subr.mxu0 0.0
    %467 = vmatpush1.msra.mxu0 0.0
    %468 = vmatprep.subr.mxu0 0.0
    %469 = vmatpush1.msra.mxu0 0.0
    %470 = vmatprep.subr.mxu0 0.0
    %471 = vmatpush1.msra.mxu0 0.0
    %472 = vmatprep.subr.mxu0 0.0
    %473 = vmatpush1.msra.mxu0 0.0
    %474 = vmatprep.subr.mxu0 0.0
    %475 = vmatpush1.msra.mxu0 0.0
    %476 = vmatprep.subr.mxu0 0.0
    %477 = vmatpush1.msra.mxu0 0.0
    %478 = vmatprep.mubr.f32.mxu0 0.0
    %479 = vmatmul.mubr.f32.gmra.mrb[0].mxu0 %v409
    %v480 = vpop.f32.mrb[0].mxu0
    %v481 = vadd.f32 0.0, %v480
    %v482 = vpop.f32.mrb[0].mxu0
    %483 = vmatprep.mubr.f32.mxu0 0.0
    %484 = vmatmul.mubr.f32.gmra.mrb[0].mxu0 %v412
    %v485 = vpop.f32.mrb[0].mxu0
    %v486 = vadd.f32 0.0, %v485
    %v487 = vpop.f32.mrb[0].mxu0
    %488 = vdwg.mxu0
    %v489 = vrcp.pop %v481
    %v490 = vrcp.pop %v486
    %v491 = vmul.f32 %v481, %v489
    %v492 = vmul.f32 %v486, %v490
    %v493 = vsub.f32 2.0, %v491
    %v494 = vsub.f32 2.0, %v492
    %v495 = vmul.f32 %v489, %v493
    %v496 = vmul.f32 %v490, %v494
    %v497 = vmul.f32 %v405, %v495
    %v498 = vmul.f32 %v407, %v496
    %v500 = vsel %vm387, %v497, 0
    %v503 = vsel %vm387, %v498, 0
    %vm505 = vcmask 1043456
    %v507 = vsel %vm505, %v54, 0
    %509 = vmatprep.subr.mxu0 0.0
    %510 = vmatpush1.msra.mxu0 %v507
    %511 = vmatprep.subr.mxu0 0.0
    %512 = vmatpush1.msra.mxu0 0.0
    %513 = vmatprep.subr.mxu0 0.0
    %514 = vmatpush1.msra.mxu0 0.0
    %515 = vmatprep.subr.mxu0 0.0
    %516 = vmatpush1.msra.mxu0 0.0
    %517 = vmatprep.subr.mxu0 0.0
    %518 = vmatpush1.msra.mxu0 0.0
    %519 = vmatprep.subr.mxu0 0.0
    %520 = vmatpush1.msra.mxu0 0.0
    %521 = vmatprep.subr.mxu0 0.0
    %522 = vmatpush1.msra.mxu0 0.0
    %523 = vmatprep.subr.mxu0 0.0
    %524 = vmatpush1.msra.mxu0 0.0
    %525 = vmatprep.subr.mxu0 0.0
    %526 = vmatpush1.msra.mxu0 0.0
    %527 = vmatprep.subr.mxu0 0.0
    %528 = vmatpush1.msra.mxu0 0.0
    %529 = vmatprep.subr.mxu0 0.0
    %530 = vmatpush1.msra.mxu0 0.0
    %531 = vmatprep.subr.mxu0 0.0
    %532 = vmatpush1.msra.mxu0 0.0
    %533 = vmatprep.subr.mxu0 0.0
    %534 = vmatpush1.msra.mxu0 0.0
    %535 = vmatprep.subr.mxu0 0.0
    %536 = vmatpush1.msra.mxu0 0.0
    %537 = vmatprep.subr.mxu0 0.0
    %538 = vmatpush1.msra.mxu0 0.0
    %539 = vmatprep.subr.mxu0 0.0
    %540 = vmatpush1.msra.mxu0 0.0
    %541 = vmatprep.subr.mxu0 0.0
    %542 = vmatpush1.msra.mxu0 0.0
    %543 = vmatprep.subr.mxu0 0.0
    %544 = vmatpush1.msra.mxu0 0.0
    %545 = vmatprep.subr.mxu0 0.0
    %546 = vmatpush1.msra.mxu0 0.0
    %547 = vmatprep.subr.mxu0 0.0
    %548 = vmatpush1.msra.mxu0 0.0
    %549 = vmatprep.subr.mxu0 0.0
    %550 = vmatpush1.msra.mxu0 0.0
    %551 = vmatprep.subr.mxu0 0.0
    %552 = vmatpush1.msra.mxu0 0.0
    %553 = vmatprep.subr.mxu0 0.0
    %554 = vmatpush1.msra.mxu0 0.0
    %555 = vmatprep.subr.mxu0 0.0
    %556 = vmatpush1.msra.mxu0 0.0
    %557 = vmatprep.subr.mxu0 0.0
    %558 = vmatpush1.msra.mxu0 0.0
    %559 = vmatprep.subr.mxu0 0.0
    %560 = vmatpush1.msra.mxu0 0.0
    %561 = vmatprep.subr.mxu0 0.0
    %562 = vmatpush1.msra.mxu0 0.0
    %563 = vmatprep.subr.mxu0 0.0
    %564 = vmatpush1.msra.mxu0 0.0
    %565 = vmatprep.subr.mxu0 0.0
    %566 = vmatpush1.msra.mxu0 0.0
    %567 = vmatprep.subr.mxu0 0.0
    %568 = vmatpush1.msra.mxu0 0.0
    %569 = vmatprep.subr.mxu0 0.0
    %570 = vmatpush1.msra.mxu0 0.0
    %571 = vmatprep.subr.mxu0 0.0
    %572 = vmatpush1.msra.mxu0 0.0
    %573 = vmatprep.mubr.f32.mxu0 0.0
    %574 = vmatmul.mubr.f32.gmra.mrb[0].mxu0 %v500
    %v575 = vpop.f32.mrb[0].mxu0
    %v576 = vadd.f32 0.0, %v575
    %v577 = vpop.f32.mrb[0].mxu0
    %578 = vmatprep.mubr.f32.mxu0 0.0
    %579 = vmatmul.mubr.f32.gmra.mrb[0].mxu0 %v503
    %v580 = vpop.f32.mrb[0].mxu0
    %v581 = vadd.f32 0.0, %v580
    %v582 = vpop.f32.mrb[0].mxu0
    %583 = vdwg.mxu0
    %584 = vrot.lane.b32.xlu0 %v188, 64
    %v585 = vpop.permute.xlu0 %584
    %586 = vrot.lane.b32.xlu0 %v193, 64
    %v587 = vpop.permute.xlu0 %586
    %v590 = vmul.f32 %v576, %v585
    %v591 = vmul.f32 %v581, %v587
    %592 = vmatprep.subr.mxu0 0.0
    %593 = vmatpush1.msra.mxu0 %v590
    %594 = vmatprep.subr.mxu0 0.0
    %595 = vmatpush1.msra.mxu0 %v591
    %596 = vmatprep.subr.mxu0 0.0
    %597 = vmatpush1.msra.mxu0 0.0
    %598 = vmatprep.subr.mxu0 0.0
    %599 = vmatpush1.msra.mxu0 0.0
    %600 = vmatprep.subr.mxu0 0.0
    %601 = vmatpush1.msra.mxu0 0.0
    %602 = vmatprep.subr.mxu0 0.0
    %603 = vmatpush1.msra.mxu0 0.0
    %604 = vmatprep.subr.mxu0 0.0
    %605 = vmatpush1.msra.mxu0 0.0
    %606 = vmatprep.subr.mxu0 0.0
    %607 = vmatpush1.msra.mxu0 0.0
    %608 = vmatprep.subr.mxu0 0.0
    %609 = vmatpush1.msra.mxu0 0.0
    %610 = vmatprep.subr.mxu0 0.0
    %611 = vmatpush1.msra.mxu0 0.0
    %612 = vmatprep.subr.mxu0 0.0
    %613 = vmatpush1.msra.mxu0 0.0
    %614 = vmatprep.subr.mxu0 0.0
    %615 = vmatpush1.msra.mxu0 0.0
    %616 = vmatprep.subr.mxu0 0.0
    %617 = vmatpush1.msra.mxu0 0.0
    %618 = vmatprep.subr.mxu0 0.0
    %619 = vmatpush1.msra.mxu0 0.0
    %620 = vmatprep.subr.mxu0 0.0
    %621 = vmatpush1.msra.mxu0 0.0
    %622 = vmatprep.subr.mxu0 0.0
    %623 = vmatpush1.msra.mxu0 0.0
    %624 = vmatprep.subr.mxu0 0.0
    %625 = vmatpush1.msra.mxu0 0.0
    %626 = vmatprep.subr.mxu0 0.0
    %627 = vmatpush1.msra.mxu0 0.0
    %628 = vmatprep.subr.mxu0 0.0
    %629 = vmatpush1.msra.mxu0 0.0
    %630 = vmatprep.subr.mxu0 0.0
    %631 = vmatpush1.msra.mxu0 0.0
    %632 = vmatprep.subr.mxu0 0.0
    %633 = vmatpush1.msra.mxu0 0.0
    %634 = vmatprep.subr.mxu0 0.0
    %635 = vmatpush1.msra.mxu0 0.0
    %636 = vmatprep.subr.mxu0 0.0
    %637 = vmatpush1.msra.mxu0 0.0
    %638 = vmatprep.subr.mxu0 0.0
    %639 = vmatpush1.msra.mxu0 0.0
    %640 = vmatprep.subr.mxu0 0.0
    %641 = vmatpush1.msra.mxu0 0.0
    %642 = vmatprep.subr.mxu0 0.0
    %643 = vmatpush1.msra.mxu0 0.0
    %644 = vmatprep.subr.mxu0 0.0
    %645 = vmatpush1.msra.mxu0 0.0
    %646 = vmatprep.subr.mxu0 0.0
    %647 = vmatpush1.msra.mxu0 0.0
    %648 = vmatprep.subr.mxu0 0.0
    %649 = vmatpush1.msra.mxu0 0.0
    %650 = vmatprep.subr.mxu0 0.0
    %651 = vmatpush1.msra.mxu0 0.0
    %652 = vmatprep.subr.mxu0 0.0
    %653 = vmatpush1.msra.mxu0 0.0
    %654 = vmatprep.subr.mxu0 0.0
    %655 = vmatpush1.msra.mxu0 0.0
    %656 = vmatprep.mubr.f32.mxu0 0.0
    %657 = vmatmul.mubr.f32.gmra.mrb[0].mxu0 %v409
    %v658 = vpop.f32.mrb[0].mxu0
    %v659 = vadd.f32 0.0, %v658
    %v660 = vpop.f32.mrb[0].mxu0
    %661 = vmatprep.mubr.f32.mxu0 0.0
    %662 = vmatmul.mubr.f32.gmra.mrb[0].mxu0 %v412
    %v663 = vpop.f32.mrb[0].mxu0
    %v664 = vadd.f32 0.0, %v663
    %v665 = vpop.f32.mrb[0].mxu0
    %666 = vdwg.mxu0
    %v667 = vlaneseq
    %v668 = vshrl.u32 %v667, 7
    %v669 = vsub.s32 0, %v668
    %v670 = vrot.slane %v58, %v669
    %675 = vrot.lane.b32.xlu0 %v42, 32
    %v676 = vpop.permute.xlu0 %675
    %677 = vrot.lane.b32.xlu0 %v43, 32
    %v678 = vpop.permute.xlu0 %677
    %679 = vrot.lane.b32.xlu0 %v44, 32
    %v680 = vpop.permute.xlu0 %679
    %681 = vrot.lane.b32.xlu0 %v45, 32
    %v682 = vpop.permute.xlu0 %681
    %v688 = vsel %vm71, %v659, 0
    %v691 = vsel %vm71, %v664, 0
    %693 = vmatprep.subr.mxu0 0.0
    %694 = vmatpush1.msra.mxu0 %v676
    %695 = vmatprep.subr.mxu0 0.0
    %696 = vmatpush1.msra.mxu0 %v678
    %697 = vmatprep.subr.mxu0 0.0
    %698 = vmatpush1.msra.mxu0 %v680
    %699 = vmatprep.subr.mxu0 0.0
    %700 = vmatpush1.msra.mxu0 %v682
    %701 = vmatprep.subr.mxu0 0.0
    %702 = vmatpush1.msra.mxu0 0.0
    %703 = vmatprep.subr.mxu0 0.0
    %704 = vmatpush1.msra.mxu0 0.0
    %705 = vmatprep.subr.mxu0 0.0
    %706 = vmatpush1.msra.mxu0 0.0
    %707 = vmatprep.subr.mxu0 0.0
    %708 = vmatpush1.msra.mxu0 0.0
    %709 = vmatprep.subr.mxu0 0.0
    %710 = vmatpush1.msra.mxu0 0.0
    %711 = vmatprep.subr.mxu0 0.0
    %712 = vmatpush1.msra.mxu0 0.0
    %713 = vmatprep.subr.mxu0 0.0
    %714 = vmatpush1.msra.mxu0 0.0
    %715 = vmatprep.subr.mxu0 0.0
    %716 = vmatpush1.msra.mxu0 0.0
    %717 = vmatprep.subr.mxu0 0.0
    %718 = vmatpush1.msra.mxu0 0.0
    %719 = vmatprep.subr.mxu0 0.0
    %720 = vmatpush1.msra.mxu0 0.0
    %721 = vmatprep.subr.mxu0 0.0
    %722 = vmatpush1.msra.mxu0 0.0
    %723 = vmatprep.subr.mxu0 0.0
    %724 = vmatpush1.msra.mxu0 0.0
    %725 = vmatprep.subr.mxu0 0.0
    %726 = vmatpush1.msra.mxu0 0.0
    %727 = vmatprep.subr.mxu0 0.0
    %728 = vmatpush1.msra.mxu0 0.0
    %729 = vmatprep.subr.mxu0 0.0
    %730 = vmatpush1.msra.mxu0 0.0
    %731 = vmatprep.subr.mxu0 0.0
    %732 = vmatpush1.msra.mxu0 0.0
    %733 = vmatprep.subr.mxu0 0.0
    %734 = vmatpush1.msra.mxu0 0.0
    %735 = vmatprep.subr.mxu0 0.0
    %736 = vmatpush1.msra.mxu0 0.0
    %737 = vmatprep.subr.mxu0 0.0
    %738 = vmatpush1.msra.mxu0 0.0
    %739 = vmatprep.subr.mxu0 0.0
    %740 = vmatpush1.msra.mxu0 0.0
    %741 = vmatprep.subr.mxu0 0.0
    %742 = vmatpush1.msra.mxu0 0.0
    %743 = vmatprep.subr.mxu0 0.0
    %744 = vmatpush1.msra.mxu0 0.0
    %745 = vmatprep.subr.mxu0 0.0
    %746 = vmatpush1.msra.mxu0 0.0
    %747 = vmatprep.subr.mxu0 0.0
    %748 = vmatpush1.msra.mxu0 0.0
    %749 = vmatprep.subr.mxu0 0.0
    %750 = vmatpush1.msra.mxu0 0.0
    %751 = vmatprep.subr.mxu0 0.0
    %752 = vmatpush1.msra.mxu0 0.0
    %753 = vmatprep.subr.mxu0 0.0
    %754 = vmatpush1.msra.mxu0 0.0
    %755 = vmatprep.subr.mxu0 0.0
    %756 = vmatpush1.msra.mxu0 0.0
    %757 = vmatprep.mubr.f32.mxu0 0.0
    %758 = vmatmul.mubr.f32.gmra.mrb[0].mxu0 %v688
    %v759 = vpop.f32.mrb[0].mxu0
    %v760 = vadd.f32 %v670, %v759
    %v761 = vpop.f32.mrb[0].mxu0
    %762 = vmatprep.mubr.f32.mxu0 0.0
    %763 = vmatmul.mubr.f32.gmra.mrb[0].mxu0 %v691
    %v764 = vpop.f32.mrb[0].mxu0
    %v765 = vadd.f32 %v670, %v764
    %v766 = vpop.f32.mrb[0].mxu0
    %767 = vdwg.mxu0
    %v768 = vlaneseq
    %v769 = vshrl.u32 %v768, 7
    %v770 = vsub.s32 0, %v769
    %v771 = vrot.slane %v63, %v770
    %v772 = vmul.f32 %v771, %v760
    %v773 = vmul.f32 %v771, %v765
    %v774 = vadd.f32 %v40, %v772
    %v775 = vadd.f32 %v41, %v773
    %v776 = vsel %vm71, %v774, 0.0
    %777 = vadd.xlane.f32.xlu0 %v776
    %v778 = vpop.xlane.xlu0 %777
    %v779 = vsel %vm71, %v775, 0.0
    %780 = vadd.xlane.f32.xlu0 %v779
    %v781 = vpop.xlane.xlu0 %780
    %v782 = vmul.f32 %v778, %v78
    %v783 = vmul.f32 %v781, %v78
    %v784 = vsub.f32 %v774, %v782
    %v785 = vsub.f32 %v775, %v783
    %v786 = vmul.f32 %v784, %v784
    %v787 = vmul.f32 %v785, %v785
    %v788 = vsel %vm71, %v786, 0.0
    %789 = vadd.xlane.f32.xlu0 %v788
    %v790 = vpop.xlane.xlu0 %789
    %v791 = vsel %vm71, %v787, 0.0
    %792 = vadd.xlane.f32.xlu0 %v791
    %v793 = vpop.xlane.xlu0 %792
    %v794 = vmul.f32 %v790, %v78
    %v795 = vmul.f32 %v793, %v78
    %v796 = vadd.f32 %v794, 1e-05
    %v797 = vadd.f32 %v795, 1e-05
    %v798 = vrsqrt.pop %v796
    %v799 = vrsqrt.pop %v797
    %v800 = vmul.f32 %v784, %v798
    %v801 = vmul.f32 %v785, %v799
    %v802 = vlaneseq
    %v803 = vshrl.u32 %v802, 7
    %v804 = vsub.s32 0, %v803
    %v805 = vrot.slane %v59, %v804
    %v806 = vmul.f32 %v800, %v805
    %v807 = vmul.f32 %v801, %v805
    %v808 = vlaneseq
    %v809 = vshrl.u32 %v808, 7
    %v810 = vsub.s32 0, %v809
    %v811 = vrot.slane %v60, %v810
    %v812 = vadd.f32 %v806, %v811
    %v813 = vadd.f32 %v807, %v811
    %v814 = vlaneseq
    %v815 = vshrl.u32 %v814, 7
    %v816 = vsub.s32 0, %v815
    %v817 = vrot.slane %v61, %v816
    %818 = vrot.lane.b32.xlu0 %v46, 96
    %v819 = vpop.permute.xlu0 %818
    %820 = vrot.lane.b32.xlu0 %v47, 96
    %v821 = vpop.permute.xlu0 %820
    %822 = vrot.lane.b32.xlu0 %v48, 96
    %v823 = vpop.permute.xlu0 %822
    %824 = vrot.lane.b32.xlu0 %v49, 96
    %v825 = vpop.permute.xlu0 %824
    %v831 = vsel %vm71, %v812, 0
    %v834 = vsel %vm71, %v813, 0
    %836 = vmatprep.subr.mxu0 0.0
    %837 = vmatpush1.msra.mxu0 %v819
    %838 = vmatprep.subr.mxu0 0.0
    %839 = vmatpush1.msra.mxu0 %v821
    %840 = vmatprep.subr.mxu0 0.0
    %841 = vmatpush1.msra.mxu0 %v823
    %842 = vmatprep.subr.mxu0 0.0
    %843 = vmatpush1.msra.mxu0 %v825
    %844 = vmatprep.subr.mxu0 0.0
    %845 = vmatpush1.msra.mxu0 0.0
    %846 = vmatprep.subr.mxu0 0.0
    %847 = vmatpush1.msra.mxu0 0.0
    %848 = vmatprep.subr.mxu0 0.0
    %849 = vmatpush1.msra.mxu0 0.0
    %850 = vmatprep.subr.mxu0 0.0
    %851 = vmatpush1.msra.mxu0 0.0
    %852 = vmatprep.subr.mxu0 0.0
    %853 = vmatpush1.msra.mxu0 0.0
    %854 = vmatprep.subr.mxu0 0.0
    %855 = vmatpush1.msra.mxu0 0.0
    %856 = vmatprep.subr.mxu0 0.0
    %857 = vmatpush1.msra.mxu0 0.0
    %858 = vmatprep.subr.mxu0 0.0
    %859 = vmatpush1.msra.mxu0 0.0
    %860 = vmatprep.subr.mxu0 0.0
    %861 = vmatpush1.msra.mxu0 0.0
    %862 = vmatprep.subr.mxu0 0.0
    %863 = vmatpush1.msra.mxu0 0.0
    %864 = vmatprep.subr.mxu0 0.0
    %865 = vmatpush1.msra.mxu0 0.0
    %866 = vmatprep.subr.mxu0 0.0
    %867 = vmatpush1.msra.mxu0 0.0
    %868 = vmatprep.subr.mxu0 0.0
    %869 = vmatpush1.msra.mxu0 0.0
    %870 = vmatprep.subr.mxu0 0.0
    %871 = vmatpush1.msra.mxu0 0.0
    %872 = vmatprep.subr.mxu0 0.0
    %873 = vmatpush1.msra.mxu0 0.0
    %874 = vmatprep.subr.mxu0 0.0
    %875 = vmatpush1.msra.mxu0 0.0
    %876 = vmatprep.subr.mxu0 0.0
    %877 = vmatpush1.msra.mxu0 0.0
    %878 = vmatprep.subr.mxu0 0.0
    %879 = vmatpush1.msra.mxu0 0.0
    %880 = vmatprep.subr.mxu0 0.0
    %881 = vmatpush1.msra.mxu0 0.0
    %882 = vmatprep.subr.mxu0 0.0
    %883 = vmatpush1.msra.mxu0 0.0
    %884 = vmatprep.subr.mxu0 0.0
    %885 = vmatpush1.msra.mxu0 0.0
    %886 = vmatprep.subr.mxu0 0.0
    %887 = vmatpush1.msra.mxu0 0.0
    %888 = vmatprep.subr.mxu0 0.0
    %889 = vmatpush1.msra.mxu0 0.0
    %890 = vmatprep.subr.mxu0 0.0
    %891 = vmatpush1.msra.mxu0 0.0
    %892 = vmatprep.subr.mxu0 0.0
    %893 = vmatpush1.msra.mxu0 0.0
    %894 = vmatprep.subr.mxu0 0.0
    %895 = vmatpush1.msra.mxu0 0.0
    %896 = vmatprep.subr.mxu0 0.0
    %897 = vmatpush1.msra.mxu0 0.0
    %898 = vmatprep.subr.mxu0 0.0
    %899 = vmatpush1.msra.mxu0 0.0
    %900 = vmatprep.mubr.f32.mxu0 0.0
    %901 = vmatmul.mubr.f32.gmra.mrb[0].mxu0 %v831
    %v902 = vpop.f32.mrb[0].mxu0
    %v903 = vadd.f32 %v817, %v902
    %v904 = vpop.f32.mrb[0].mxu0
    %905 = vmatprep.mubr.f32.mxu0 0.0
    %906 = vmatmul.mubr.f32.gmra.mrb[0].mxu0 %v834
    %v907 = vpop.f32.mrb[0].mxu0
    %v908 = vadd.f32 %v817, %v907
    %v909 = vpop.f32.mrb[0].mxu0
    %910 = vdwg.mxu0
    %v911 = vmul.f32 %v903, 0.5
    %v912 = vmul.f32 %v908, 0.5
    %v913 = vmul.f32 %v903, 0.70710677
    %v914 = vmul.f32 %v908, 0.70710677
    %v915 = vand.u32 2147483647, %v913
    %v916 = vand.u32 2147483647, %v914
    %v917 = vmul.f32 %v915, 0.3275911
    %v918 = vmul.f32 %v916, 0.3275911
    %v919 = vadd.f32 %v917, 1.0
    %v920 = vadd.f32 %v918, 1.0
    %v921 = vrcp.pop %v919
    %v922 = vmul.f32 1.0, %v921
    %v923 = vrcp.pop %v920
    %v924 = vmul.f32 1.0, %v923
    %v925 = vmul.f32 %v922, 1.0614054
    %v926 = vmul.f32 %v924, 1.0614054
    %v927 = vadd.f32 %v925, -1.4531521
    %v928 = vadd.f32 %v926, -1.4531521
    %v929 = vmul.f32 %v927, %v922
    %v930 = vmul.f32 %v928, %v924
    %v931 = vadd.f32 %v929, 1.4214138
    %v932 = vadd.f32 %v930, 1.4214138
    %v933 = vmul.f32 %v931, %v922
    %v934 = vmul.f32 %v932, %v924
    %v935 = vadd.f32 %v933, -0.28449672
    %v936 = vadd.f32 %v934, -0.28449672
    %v937 = vmul.f32 %v935, %v922
    %v938 = vmul.f32 %v936, %v924
    %v939 = vadd.f32 %v937, 0.2548296
    %v940 = vadd.f32 %v938, 0.2548296
    %v941 = vmul.f32 %v939, %v922
    %v942 = vmul.f32 %v940, %v924
    %v943 = vsub.f32 0.0, %v915
    %v944 = vsub.f32 0.0, %v916
    %v945 = vmul.f32 %v943, %v915
    %v946 = vmul.f32 %v944, %v916
    %v947 = vmul.f32 %v945, 1.442695
    %v948 = vpow.pop %v947
    %v949 = vmul.f32 %v946, 1.442695
    %v950 = vpow.pop %v949
    %v951 = vmul.f32 %v941, %v948
    %v952 = vmul.f32 %v942, %v950
    %v953 = vsub.f32 1.0, %v951
    %v954 = vsub.f32 1.0, %v952
    %vm955 = vcmp.lt.f32.partialorder %v913, 0.0
    %vm956 = vcmp.lt.f32.partialorder %v914, 0.0
    %v957 = vsub.f32 0.0, %v953
    %v958 = vsub.f32 0.0, %v954
    %v959 = vsel %vm955, %v957, %v953
    %v960 = vsel %vm956, %v958, %v954
    %v961 = vadd.f32 %v959, 1.0
    %v962 = vadd.f32 %v960, 1.0
    %v963 = vmul.f32 %v911, %v961
    %v964 = vmul.f32 %v912, %v962
    %v965 = vlaneseq
    %v966 = vshrl.u32 %v965, 7
    %v967 = vsub.s32 0, %v966
    %v968 = vrot.slane %v62, %v967
    %vm969 = vcmask 523264
    %v971 = vsel %vm969, %v963, 0
    %v974 = vsel %vm969, %v964, 0
    %976 = vmatprep.subr.mxu0 0.0
    %977 = vmatpush1.msra.mxu0 %v46
    %978 = vmatprep.subr.mxu0 0.0
    %979 = vmatpush1.msra.mxu0 %v47
    %980 = vmatprep.subr.mxu0 0.0
    %981 = vmatpush1.msra.mxu0 %v48
    %982 = vmatprep.subr.mxu0 0.0
    %983 = vmatpush1.msra.mxu0 %v49
    %984 = vmatprep.subr.mxu0 0.0
    %985 = vmatpush1.msra.mxu0 %v50
    %986 = vmatprep.subr.mxu0 0.0
    %987 = vmatpush1.msra.mxu0 %v51
    %988 = vmatprep.subr.mxu0 0.0
    %989 = vmatpush1.msra.mxu0 %v52
    %990 = vmatprep.subr.mxu0 0.0
    %991 = vmatpush1.msra.mxu0 %v53
    %992 = vmatprep.subr.mxu0 0.0
    %993 = vmatpush1.msra.mxu0 0.0
    %994 = vmatprep.subr.mxu0 0.0
    %995 = vmatpush1.msra.mxu0 0.0
    %996 = vmatprep.subr.mxu0 0.0
    %997 = vmatpush1.msra.mxu0 0.0
    %998 = vmatprep.subr.mxu0 0.0
    %999 = vmatpush1.msra.mxu0 0.0
    %1000 = vmatprep.subr.mxu0 0.0
    %1001 = vmatpush1.msra.mxu0 0.0
    %1002 = vmatprep.subr.mxu0 0.0
    %1003 = vmatpush1.msra.mxu0 0.0
    %1004 = vmatprep.subr.mxu0 0.0
    %1005 = vmatpush1.msra.mxu0 0.0
    %1006 = vmatprep.subr.mxu0 0.0
    %1007 = vmatpush1.msra.mxu0 0.0
    %1008 = vmatprep.subr.mxu0 0.0
    %1009 = vmatpush1.msra.mxu0 0.0
    %1010 = vmatprep.subr.mxu0 0.0
    %1011 = vmatpush1.msra.mxu0 0.0
    %1012 = vmatprep.subr.mxu0 0.0
    %1013 = vmatpush1.msra.mxu0 0.0
    %1014 = vmatprep.subr.mxu0 0.0
    %1015 = vmatpush1.msra.mxu0 0.0
    %1016 = vmatprep.subr.mxu0 0.0
    %1017 = vmatpush1.msra.mxu0 0.0
    %1018 = vmatprep.subr.mxu0 0.0
    %1019 = vmatpush1.msra.mxu0 0.0
    %1020 = vmatprep.subr.mxu0 0.0
    %1021 = vmatpush1.msra.mxu0 0.0
    %1022 = vmatprep.subr.mxu0 0.0
    %1023 = vmatpush1.msra.mxu0 0.0
    %1024 = vmatprep.subr.mxu0 0.0
    %1025 = vmatpush1.msra.mxu0 0.0
    %1026 = vmatprep.subr.mxu0 0.0
    %1027 = vmatpush1.msra.mxu0 0.0
    %1028 = vmatprep.subr.mxu0 0.0
    %1029 = vmatpush1.msra.mxu0 0.0
    %1030 = vmatprep.subr.mxu0 0.0
    %1031 = vmatpush1.msra.mxu0 0.0
    %1032 = vmatprep.subr.mxu0 0.0
    %1033 = vmatpush1.msra.mxu0 0.0
    %1034 = vmatprep.subr.mxu0 0.0
    %1035 = vmatpush1.msra.mxu0 0.0
    %1036 = vmatprep.subr.mxu0 0.0
    %1037 = vmatpush1.msra.mxu0 0.0
    %1038 = vmatprep.subr.mxu0 0.0
    %1039 = vmatpush1.msra.mxu0 0.0
    %1040 = vmatprep.mubr.f32.mxu0 0.0
    %1041 = vmatmul.mubr.f32.gmra.mrb[0].mxu0 %v971
    %v1042 = vpop.f32.mrb[0].mxu0
    %v1043 = vadd.f32 %v968, %v1042
    %v1044 = vpop.f32.mrb[0].mxu0
    %1045 = vmatprep.mubr.f32.mxu0 0.0
    %1046 = vmatmul.mubr.f32.gmra.mrb[0].mxu0 %v974
    %v1047 = vpop.f32.mrb[0].mxu0
    %v1048 = vadd.f32 %v968, %v1047
    %v1049 = vpop.f32.mrb[0].mxu0
    %1050 = vdwg.mxu0
    %v1051 = vlaneseq
    %v1052 = vshrl.u32 %v1051, 7
    %v1053 = vsub.s32 0, %v1052
    %v1054 = vrot.slane %v64, %v1053
    %v1055 = vmul.f32 %v1054, %v1043
    %v1056 = vmul.f32 %v1054, %v1048
    %v1057 = vadd.f32 %v812, %v1055
    %v1058 = vadd.f32 %v813, %v1056
    %v1059 = vmul.f32 %v771, %v109
    %v1060 = vmul.f32 %v771, %v110
    %v1061 = vadd.f32 %v40, %v1059
    %v1062 = vadd.f32 %v41, %v1060
    %v1063 = vmul.f32 %v1061, 2.0
    %v1064 = vmul.f32 %v1062, 2.0
    %vm1065 = vcmp.gt.f32.partialorder %v69, 0.5
    %vm1066 = vcmp.gt.f32.partialorder %v70, 0.5
    %v1067 = vsel %vm1065, 1, 0
    %v1068 = vsel %vm1066, 1, 0
    %1069 = vset.pattern.permute.xlu0 0
    %1070 = vperm.xlu0 %1069, %v1067
    %v1071 = vpop.permute.xlu0 %1070
    %1072 = vset.pattern.permute.xlu0 0
    %1073 = vperm.xlu0 %1072, %v1068
    %v1074 = vpop.permute.xlu0 %1073
    %vm1075 = vcmp.eq.s32.totalorder %v1071, 1
    %vm1076 = vcmp.eq.s32.totalorder %v1074, 1
    %v1077 = vsel %vm1075, %v1057, %v1063
    %v1078 = vsel %vm1076, %v1058, %v1064
    %1079 = vst.msk [vmem:[#allocation7] sm:$0xff] %vm71, %v1077
    %1080 = vst.msk [vmem:[#allocation7 + $0x8] sm:$0xff] %vm71, %v1078
    // Predicated region
    $region18: #{class_attention_block.1} parent=1 // pred_check
      _
    $region19: #{class_attention_block.1} parent=1 // pred_check_branch
      %1082 = sbr.rel (0) target = $region21
    $region20: #{class_attention_block.1} parent=1 // pred_region
      %s1084 = ssub.s32 256, 256
      %1085 = vsyncadd [#allocation4], %s1084
      %s1086 = sshll.u32 [#allocation7], 4
      %s1087 = int_to_ptr.vmem [resolvable:$true] %s1086
      %1092 = dma.vmem_to_hbm [thread:$0]  %s1087, 256, %s2, [#allocation4], 128, 128, 8
    $region21: #{class_attention_block.1} parent=1 // pred_fallthru
      _
    // Predicated region
    $region22: #{class_attention_block.1} parent=1 // pred_check
      _
    $region23: #{class_attention_block.1} parent=1 // pred_check_branch
      %1094 = sbr.rel (0) target = $region25
    $region24: #{class_attention_block.1} parent=1 // pred_region
      %1095 = dma.done [#allocation4], 256
    $region25: #{class_attention_block.1} parent=1 // pred_fallthru
      _
    %1096 = vsyncpa [#allocation3], 1
    %1097 = vsyncpa [#allocation6], 1
    %1098 = vsyncpa [#allocation4], 1

</llo_original>
